<compile_context>
chip_gen: v5e
topology: v5e:2x2
jax: 0.10.0
libtpu: 0.0.40
codegen_flags: <defaults>
</compile_context>

<pallas_src>
import jax
import jax.numpy as jnp
import numpy as np
from jax.experimental import pallas as pl
from jax.experimental.pallas import tpu as pltpu

# ---------------- model hyper-parameters (match the PyTorch module) ----------
FEATURES_IN = 34                                        # input feature length
FEATURES_OUT = 7                                        # emotion classes
MIDDLE_LAYER = 32
KERNEL_SIZE = 5
CHANNELS = 32
PADDING = 1
L_OUT = FEATURES_IN - KERNEL_SIZE + 2 * PADDING + 1     # 32 conv output len
FLAT = CHANNELS * L_OUT                                 # 1024 flatten size
HIDDEN1 = 120

# lane-dense padded widths (multiples of 128); zero-padding preserves the math
H1P = 128                                               # 120 -> 128
MIDP = 128                                              # 32  -> 128
OUTP = 128                                              # 7   -> 128

BATCH = 32                                              # demo batch


# ----------------------------- Pallas kernel ---------------------------------
def _emotion_kernel(x_ref, wb_ref, bb_ref, w1_ref, b1_ref,
                    w2_ref, b2_ref, w3_ref, b3_ref, out_ref):
    """Whole forward pass for one batch tile: 4 back-to-back MXU matmuls."""
    x = x_ref[...]                                                   # (TM, 34)

    # conv1d + bias + ReLU + flatten == one banded matmul
    h = jnp.dot(x, wb_ref[...], preferred_element_type=jnp.float32) + bb_ref[...]
    h = jnp.maximum(h, 0.0)                                          # (TM, 1024)

    h1 = jnp.dot(h, w1_ref[...], preferred_element_type=jnp.float32) + b1_ref[...]
    h1 = jnp.maximum(h1, 0.0)                                        # (TM, 128)

    h2 = jnp.dot(h1, w2_ref[...], preferred_element_type=jnp.float32) + b2_ref[...]
    h2 = jnp.maximum(h2, 0.0)                                        # (TM, 128)

    out_ref[...] = (jnp.dot(h2, w3_ref[...], preferred_element_type=jnp.float32)
                    + b3_ref[...])                                   # (TM, 128)


# --------------------------- host-side weight prep ---------------------------
def pack_params(tparams):
    """Build kernel-layout weights from torch-layout params (one-time prep)."""
    w_conv, b_conv, w1, b1, w2, b2, w3, b3 = (np.asarray(p, np.float32)
                                              for p in tparams)

    # Banded conv+flatten matrix (34, 1024); conv zero-padding folded in.
    # Column ordering c*L_OUT + l matches torch.nn.Flatten on (B, C, L).
    wb = np.zeros((FEATURES_IN, FLAT), np.float32)
    for c in range(CHANNELS):
        for l in range(L_OUT):
            for k in range(KERNEL_SIZE):
                i = l + k - PADDING          # raw-input index (pad folded in)
                if 0 <= i < FEATURES_IN:
                    wb[i, c * L_OUT + l] = w_conv[c, k]
    bb = np.repeat(b_conv, L_OUT)[None, :]                # (1, 1024)

    w1p = np.zeros((FLAT, H1P), np.float32);  w1p[:, :HIDDEN1] = w1.T
    b1p = np.zeros((1, H1P), np.float32);     b1p[0, :HIDDEN1] = b1
    w2p = np.zeros((H1P, MIDP), np.float32);  w2p[:HIDDEN1, :MIDDLE_LAYER] = w2.T
    b2p = np.zeros((1, MIDP), np.float32);    b2p[0, :MIDDLE_LAYER] = b2
    w3p = np.zeros((MIDP, OUTP), np.float32); w3p[:MIDDLE_LAYER, :FEATURES_OUT] = w3.T
    b3p = np.zeros((1, OUTP), np.float32);    b3p[0, :FEATURES_OUT] = b3

    return tuple(jnp.asarray(a) for a in
                 (wb, bb, w1p, b1p, w2p, b2p, w3p, b3p))


# ------------------------------- wrapper --------------------------------------
def emotion_nn_forward(x, kparams):
    """x: (B, features_in) or (B, 1, features_in) float32."""
    if x.ndim == 3:                                        # mirror np.ndim check
        x = x[:, 0, :]
    x = x.astype(jnp.float32)
    B = x.shape[0]

    # Batch tile: 256 rows fills the v6e/v7x 256x256 MXU (two passes on v5e's
    # 128-high MXU, which is fine); small batches round up to a multiple of 8
    # so sublanes are full.
    TM = 256 if B >= 256 else max(8, ((B + 7) // 8) * 8)
    B_pad = ((B + TM - 1) // TM) * TM
    if B_pad != B:
        x = jnp.pad(x, ((0, B_pad - B), (0, 0)))

    wb, bb, w1p, b1p, w2p, b2p, w3p, b3p = kparams

    def resident(shape):                                   # weights: always block 0
        return pl.BlockSpec(shape, lambda i: (0, 0))

    out = pl.pallas_call(
        _emotion_kernel,
        out_shape=jax.ShapeDtypeStruct((B_pad, OUTP), jnp.float32),
        grid=(B_pad // TM,),
        in_specs=[
            pl.BlockSpec((TM, FEATURES_IN), lambda i: (i, 0)),   # x tile
            resident((FEATURES_IN, FLAT)),                       # W_band
            resident((1, FLAT)),                                 # b_band
            resident((FLAT, H1P)),
            resident((1, H1P)),
            resident((H1P, MIDP)),
            resident((1, MIDP)),
            resident((MIDP, OUTP)),
            resident((1, OUTP)),
        ],
        out_specs=pl.BlockSpec((TM, OUTP), lambda i: (i, 0)),
        compiler_params=pltpu.CompilerParams(
            dimension_semantics=("parallel",)),                  # 2 TCs on v7x
    )(x, wb, bb, w1p, b1p, w2p, b2p, w3p, b3p)

    return out[:B, :FEATURES_OUT]


# ------------------------- init + pure-JAX reference --------------------------
def init_params(key):
    """Torch-layout params with PyTorch default uniform(-1/sqrt(fan_in)) init."""
    ks = jax.random.split(key, 8)

    def u(k, shape, fan_in):
        bound = 1.0 / np.sqrt(fan_in)
        return jax.random.uniform(k, shape, jnp.float32, -bound, bound)

    w_conv = u(ks[0], (CHANNELS, KERNEL_SIZE), KERNEL_SIZE)   # (C,1,K) squeezed
    b_conv = u(ks[1], (CHANNELS,), KERNEL_SIZE)
    w1 = u(ks[2], (HIDDEN1, FLAT), FLAT)
    b1 = u(ks[3], (HIDDEN1,), FLAT)
    w2 = u(ks[4], (MIDDLE_LAYER, HIDDEN1), HIDDEN1)
    b2 = u(ks[5], (MIDDLE_LAYER,), HIDDEN1)
    w3 = u(ks[6], (FEATURES_OUT, MIDDLE_LAYER), MIDDLE_LAYER)
    b3 = u(ks[7], (FEATURES_OUT,), MIDDLE_LAYER)
    return (w_conv, b_conv, w1, b1, w2, b2, w3, b3)


def reference_forward(x, tparams):
    """Pure-JAX reference of the PyTorch forward for a correctness check."""
    w_conv, b_conv, w1, b1, w2, b2, w3, b3 = tparams
    xp = jnp.pad(x.astype(jnp.float32), ((0, 0), (PADDING, PADDING)))
    cols = jnp.stack([xp[:, k:k + L_OUT] for k in range(KERNEL_SIZE)], axis=-1)
    conv = jnp.einsum('blk,ck->bcl', cols, w_conv) + b_conv[None, :, None]
    h = jax.nn.relu(conv).reshape(x.shape[0], FLAT)
    h1 = jax.nn.relu(h @ w1.T + b1)
    h2 = jax.nn.relu(h1 @ w2.T + b2)
    return h2 @ w3.T + b3


if __name__ == "__main__":
    key = jax.random.PRNGKey(0)
    pkey, xkey = jax.random.split(key)
    tparams = init_params(pkey)
    kparams = pack_params(tparams)

    x = jax.random.normal(xkey, (BATCH, FEATURES_IN), jnp.float32)

    out = emotion_nn_forward(x, kparams)
    out = jax.block_until_ready(out)

    ref = reference_forward(x, tparams)
    assert out.shape == (BATCH, FEATURES_OUT)
    np.testing.assert_allclose(np.asarray(out), np.asarray(ref),
                               rtol=2e-3, atol=2e-3)
    print("KERNEL_OK")
</pallas_src>

<mosaic_0001>
module attributes {stable_mosaic.version = 11 : i64} {
  func.func @_emotion_kernel(%arg0: i32, %arg1: memref<32x34xf32, #tpu.memory_space<vmem>>, %arg2: memref<34x1024xf32, #tpu.memory_space<vmem>>, %arg3: memref<1x1024xf32, #tpu.memory_space<vmem>>, %arg4: memref<1024x128xf32, #tpu.memory_space<vmem>>, %arg5: memref<1x128xf32, #tpu.memory_space<vmem>>, %arg6: memref<128x128xf32, #tpu.memory_space<vmem>>, %arg7: memref<1x128xf32, #tpu.memory_space<vmem>>, %arg8: memref<128x128xf32, #tpu.memory_space<vmem>>, %arg9: memref<1x128xf32, #tpu.memory_space<vmem>>, %arg10: memref<32x128xf32, #tpu.memory_space<vmem>>) attributes {dimension_semantics = [#tpu.dimension_semantics<parallel>], iteration_bounds = array<i64: 1>, scalar_prefetch = 0 : i64, scratch_operands = 0 : i64, tpu.core_type = #tpu.core_type<tc>, window_params = [{transform_indices = @transform_0, window_bounds = array<i64: 32, 34>}, {pipeline_mode = #tpu.pipeline_mode<synchronous>, transform_indices = @transform_1, window_bounds = array<i64: 34, 1024>}, {pipeline_mode = #tpu.pipeline_mode<synchronous>, transform_indices = @transform_2, window_bounds = array<i64: 1, 1024>}, {pipeline_mode = #tpu.pipeline_mode<synchronous>, transform_indices = @transform_3, window_bounds = array<i64: 1024, 128>}, {pipeline_mode = #tpu.pipeline_mode<synchronous>, transform_indices = @transform_4, window_bounds = array<i64: 1, 128>}, {pipeline_mode = #tpu.pipeline_mode<synchronous>, transform_indices = @transform_5, window_bounds = array<i64: 128, 128>}, {pipeline_mode = #tpu.pipeline_mode<synchronous>, transform_indices = @transform_6, window_bounds = array<i64: 1, 128>}, {pipeline_mode = #tpu.pipeline_mode<synchronous>, transform_indices = @transform_7, window_bounds = array<i64: 128, 128>}, {pipeline_mode = #tpu.pipeline_mode<synchronous>, transform_indices = @transform_8, window_bounds = array<i64: 1, 128>}, {transform_indices = @transform_9, window_bounds = array<i64: 32, 128>}]} {
    %c0 = arith.constant 0 : index
    %c0_0 = arith.constant 0 : index
    %0 = vector.load %arg1[%c0, %c0_0] : memref<32x34xf32, #tpu.memory_space<vmem>>, vector<32x34xf32>
    %c0_1 = arith.constant 0 : index
    %c0_2 = arith.constant 0 : index
    %1 = vector.load %arg2[%c0_1, %c0_2] : memref<34x1024xf32, #tpu.memory_space<vmem>>, vector<34x1024xf32>
    %cst = arith.constant dense<0.000000e+00> : vector<32x1024xf32>
    %2 = tpu.matmul %0, %1, %cst {dimension_numbers = #tpu.dot_dimension_numbers<[1], [0], [0], [1], [0, 0, 1, 1], [], []>} : vector<32x34xf32>, vector<34x1024xf32>, vector<32x1024xf32> -> vector<32x1024xf32>
    %c0_3 = arith.constant 0 : index
    %c0_4 = arith.constant 0 : index
    %3 = vector.load %arg3[%c0_3, %c0_4] : memref<1x1024xf32, #tpu.memory_space<vmem>>, vector<1x1024xf32>
    %4 = vector.broadcast %3 : vector<1x1024xf32> to vector<32x1024xf32>
    %5 = arith.addf %2, %4 : vector<32x1024xf32>
    %cst_5 = arith.constant 0.000000e+00 : f32
    %6 = vector.broadcast %cst_5 : f32 to vector<32x1024xf32>
    %7 = arith.maximumf %5, %6 : vector<32x1024xf32>
    %c0_6 = arith.constant 0 : index
    %c0_7 = arith.constant 0 : index
    %8 = vector.load %arg4[%c0_6, %c0_7] : memref<1024x128xf32, #tpu.memory_space<vmem>>, vector<1024x128xf32>
    %cst_8 = arith.constant dense<0.000000e+00> : vector<32x128xf32>
    %9 = tpu.matmul %7, %8, %cst_8 {dimension_numbers = #tpu.dot_dimension_numbers<[1], [0], [0], [1], [0, 0, 1, 1], [], []>} : vector<32x1024xf32>, vector<1024x128xf32>, vector<32x128xf32> -> vector<32x128xf32>
    %c0_9 = arith.constant 0 : index
    %c0_10 = arith.constant 0 : index
    %10 = vector.load %arg5[%c0_9, %c0_10] : memref<1x128xf32, #tpu.memory_space<vmem>>, vector<1x128xf32>
    %11 = vector.broadcast %10 : vector<1x128xf32> to vector<32x128xf32>
    %12 = arith.addf %9, %11 : vector<32x128xf32>
    %cst_11 = arith.constant 0.000000e+00 : f32
    %13 = vector.broadcast %cst_11 : f32 to vector<32x128xf32>
    %14 = arith.maximumf %12, %13 : vector<32x128xf32>
    %c0_12 = arith.constant 0 : index
    %c0_13 = arith.constant 0 : index
    %15 = vector.load %arg6[%c0_12, %c0_13] : memref<128x128xf32, #tpu.memory_space<vmem>>, vector<128x128xf32>
    %cst_14 = arith.constant dense<0.000000e+00> : vector<32x128xf32>
    %16 = tpu.matmul %14, %15, %cst_14 {dimension_numbers = #tpu.dot_dimension_numbers<[1], [0], [0], [1], [0, 0, 1, 1], [], []>} : vector<32x128xf32>, vector<128x128xf32>, vector<32x128xf32> -> vector<32x128xf32>
    %c0_15 = arith.constant 0 : index
    %c0_16 = arith.constant 0 : index
    %17 = vector.load %arg7[%c0_15, %c0_16] : memref<1x128xf32, #tpu.memory_space<vmem>>, vector<1x128xf32>
    %18 = vector.broadcast %17 : vector<1x128xf32> to vector<32x128xf32>
    %19 = arith.addf %16, %18 : vector<32x128xf32>
    %cst_17 = arith.constant 0.000000e+00 : f32
    %20 = vector.broadcast %cst_17 : f32 to vector<32x128xf32>
    %21 = arith.maximumf %19, %20 : vector<32x128xf32>
    %c0_18 = arith.constant 0 : index
    %c0_19 = arith.constant 0 : index
    %22 = vector.load %arg8[%c0_18, %c0_19] : memref<128x128xf32, #tpu.memory_space<vmem>>, vector<128x128xf32>
    %cst_20 = arith.constant dense<0.000000e+00> : vector<32x128xf32>
    %23 = tpu.matmul %21, %22, %cst_20 {dimension_numbers = #tpu.dot_dimension_numbers<[1], [0], [0], [1], [0, 0, 1, 1], [], []>} : vector<32x128xf32>, vector<128x128xf32>, vector<32x128xf32> -> vector<32x128xf32>
    %c0_21 = arith.constant 0 : index
    %c0_22 = arith.constant 0 : index
    %24 = vector.load %arg9[%c0_21, %c0_22] : memref<1x128xf32, #tpu.memory_space<vmem>>, vector<1x128xf32>
    %25 = vector.broadcast %24 : vector<1x128xf32> to vector<32x128xf32>
    %26 = arith.addf %23, %25 : vector<32x128xf32>
    %c0_23 = arith.constant 0 : index
    %c0_24 = arith.constant 0 : index
    %27 = vector.load %arg10[%c0_23, %c0_24] : memref<32x128xf32, #tpu.memory_space<vmem>>, vector<32x128xf32>
    tpu.vector_store %arg10[%c0_23, %c0_24], %26 {strides = array<i32>} : memref<32x128xf32, #tpu.memory_space<vmem>>, vector<32x128xf32>,
    return
  }
  func.func @transform_0(%arg0: i32) -> (i32, i32) {
    %c0_i32 = arith.constant 0 : i32
    %c0_i32_0 = arith.constant 0 : i32
    return %arg0, %c0_i32 : i32, i32
  }
  func.func @transform_1(%arg0: i32) -> (i32, i32) {
    %c0_i32 = arith.constant 0 : i32
    %c0_i32_0 = arith.constant 0 : i32
    %c0_i32_1 = arith.constant 0 : i32
    return %c0_i32, %c0_i32_0 : i32, i32
  }
  func.func @transform_2(%arg0: i32) -> (i32, i32) {
    %c0_i32 = arith.constant 0 : i32
    %c0_i32_0 = arith.constant 0 : i32
    %c0_i32_1 = arith.constant 0 : i32
    return %c0_i32, %c0_i32_0 : i32, i32
  }
  func.func @transform_3(%arg0: i32) -> (i32, i32) {
    %c0_i32 = arith.constant 0 : i32
    %c0_i32_0 = arith.constant 0 : i32
    %c0_i32_1 = arith.constant 0 : i32
    return %c0_i32, %c0_i32_0 : i32, i32
  }
  func.func @transform_4(%arg0: i32) -> (i32, i32) {
    %c0_i32 = arith.constant 0 : i32
    %c0_i32_0 = arith.constant 0 : i32
    %c0_i32_1 = arith.constant 0 : i32
    return %c0_i32, %c0_i32_0 : i32, i32
  }
  func.func @transform_5(%arg0: i32) -> (i32, i32) {
    %c0_i32 = arith.constant 0 : i32
    %c0_i32_0 = arith.constant 0 : i32
    %c0_i32_1 = arith.constant 0 : i32
    return %c0_i32, %c0_i32_0 : i32, i32
  }
  func.func @transform_6(%arg0: i32) -> (i32, i32) {
    %c0_i32 = arith.constant 0 : i32
    %c0_i32_0 = arith.constant 0 : i32
    %c0_i32_1 = arith.constant 0 : i32
    return %c0_i32, %c0_i32_0 : i32, i32
  }
  func.func @transform_7(%arg0: i32) -> (i32, i32) {
    %c0_i32 = arith.constant 0 : i32
    %c0_i32_0 = arith.constant 0 : i32
    %c0_i32_1 = arith.constant 0 : i32
    return %c0_i32, %c0_i32_0 : i32, i32
  }
  func.func @transform_8(%arg0: i32) -> (i32, i32) {
    %c0_i32 = arith.constant 0 : i32
    %c0_i32_0 = arith.constant 0 : i32
    %c0_i32_1 = arith.constant 0 : i32
    return %c0_i32, %c0_i32_0 : i32, i32
  }
  func.func @transform_9(%arg0: i32) -> (i32, i32) {
    %c0_i32 = arith.constant 0 : i32
    %c0_i32_0 = arith.constant 0 : i32
    return %arg0, %c0_i32 : i32, i32
  }
}

</mosaic_0001>

<llo_original>
// kernel: tpu_custom_call.1
$region0: #{tpu_custom_call.1}
  #allocation0 [shape = 'u32[]', space=smem, size = 0x4, offset = 0x4, fixed_abs, tag = 'smem constant byte address 0x4 - core index']
  #allocation1 [shape = 'u32[72,128]{1,0:T(1,128)}', space=vmem, size = 0x9000, scoped, tag = 'internal scratch']
  %s0 = inlined_call_operand.hbm [shape: f32[32,34], index: 0, kind: input, shape index: {}]
  %s1 = inlined_call_operand.hbm [shape: f32[34,1024], index: 1, kind: input, shape index: {}]
  %s2 = inlined_call_operand.hbm [shape: f32[1,1024], index: 2, kind: input, shape index: {}]
  %s3 = inlined_call_operand.hbm [shape: f32[1024,128], index: 3, kind: input, shape index: {}]
  %s4 = inlined_call_operand.vmem [shape: f32[1,128], index: 4, kind: input, shape index: {}]
  %s5 = inlined_call_operand.hbm [shape: f32[128,128], index: 5, kind: input, shape index: {}]
  %s6 = inlined_call_operand.vmem [shape: f32[1,128], index: 6, kind: input, shape index: {}]
  %s7 = inlined_call_operand.hbm [shape: f32[128,128], index: 7, kind: input, shape index: {}]
  %s8 = inlined_call_operand.vmem [shape: f32[1,128], index: 8, kind: input, shape index: {}]
  %s9 = inlined_call_operand.hbm [shape: f32[32,128], index: 9, kind: output, shape index: {}]
  %s10 = sld [smem:[#allocation0]]
  $region70: #{tpu_custom_call.1} parent=0
    _
  %s12 = ssub.s32 1, %s10
  %s13 = scalar_select 0, %s12, %s10
  $region1: #{tpu_custom_call.1} parent=0
    #allocation2 [shape = 'u8[16384]{0}', space=vmem, size = 0x4000, scoped, tag = 'input window, operand 0, single buffered']
    #allocation3 [shape = 's32[1]{0}', space=sflag, size = 0x4, scoped, tag = 'scoped memory for tpu_custom_call.1']
    #allocation4 [shape = 's32[1]{0}', space=sflag, size = 0x4, scoped, tag = 'scoped memory for tpu_custom_call.1']
    #allocation5 [shape = 'u8[163840]{0}', space=vmem, size = 0x28000, scoped, tag = 'input window, operand 1, single buffered']
    #allocation6 [shape = 's32[1]{0}', space=sflag, size = 0x4, scoped, tag = 'scoped memory for tpu_custom_call.1']
    #allocation7 [shape = 'u8[4096]{0}', space=vmem, size = 0x1000, scoped, tag = 'input window, operand 2, single buffered']
    #allocation8 [shape = 'u8[524288]{0}', space=vmem, size = 0x80000, scoped, tag = 'input window, operand 3, single buffered']
    #allocation9 [shape = 's32[1]{0}', space=sflag, size = 0x4, scoped, tag = 'scoped memory for tpu_custom_call.1']
    #allocation10 [shape = 'u8[65536]{0}', space=vmem, size = 0x10000, scoped, tag = 'input window, operand 5, single buffered']
    #allocation11 [shape = 'u8[65536]{0}', space=vmem, size = 0x10000, scoped, tag = 'input window, operand 7, single buffered']
    #allocation12 [shape = 's32[1]{0}', space=sflag, size = 0x4, scoped, tag = 'scoped memory for tpu_custom_call.1']
    #allocation13 [shape = 'u8[16384]{0}', space=vmem, size = 0x4000, scoped, tag = 'output window, operand 0, single buffered']
    %14 = vsyncpa [#allocation3], 0
    %15 = vsyncpa [#allocation6], 0
    %16 = vsyncpa [#allocation9], 0
    %17 = vsyncpa [#allocation12], 0
    %18 = vsyncpa [#allocation4], 0
    // Predicated region
    $region2: #{tpu_custom_call.1} parent=1 // pred_check
      _
    $region3: #{tpu_custom_call.1} parent=1 // pred_check_branch
      %20 = sbr.rel (0) target = $region5
    $region4: #{tpu_custom_call.1} parent=1 // pred_region
      %22 = vsyncadd [#allocation3], 0
      %s23 = sshll.u32 %s0, 4
      %s24 = int_to_ptr.hbm [resolvable:$true] %s23
      %s25 = sshll.u32 [#allocation2], 4
      %s26 = int_to_ptr.vmem [resolvable:$true] %s25
      %31 = dma.hbm_to_vmem [thread:$0]  %s24, 512, %s26, [#allocation3], 128, 128, 8
    $region5: #{tpu_custom_call.1} parent=1 // pred_fallthru
      _
    // Predicated region
    $region6: #{tpu_custom_call.1} parent=1 // pred_check
      _
    $region7: #{tpu_custom_call.1} parent=1 // pred_check_branch
      %33 = sbr.rel (0) target = $region9
    $region8: #{tpu_custom_call.1} parent=1 // pred_region
      %35 = vsyncadd [#allocation6], 0
      %s36 = sshll.u32 %s1, 4
      %s37 = int_to_ptr.hbm [resolvable:$true] %s36
      %s38 = sshll.u32 [#allocation5], 4
      %s39 = int_to_ptr.vmem [resolvable:$true] %s38
      %44 = dma.hbm_to_vmem [thread:$0]  %s37, 5120, %s39, [#allocation6], 1024, 1024, 64
    $region9: #{tpu_custom_call.1} parent=1 // pred_fallthru
      _
    // Predicated region
    $region10: #{tpu_custom_call.1} parent=1 // pred_check
      _
    $region11: #{tpu_custom_call.1} parent=1 // pred_check_branch
      %46 = sbr.rel (0) target = $region13
    $region12: #{tpu_custom_call.1} parent=1 // pred_region
      %48 = vsyncadd [#allocation6], 0
      %s50 = sshll.u32 %s2, 4
      %s51 = int_to_ptr.hbm [resolvable:$true] %s50
      %s52 = sshll.u32 [#allocation7], 4
      %s53 = int_to_ptr.vmem [resolvable:$true] %s52
      %55 = dma.hbm_to_vmem [thread:$0]  %s51, 128, %s53, [#allocation6]
    $region13: #{tpu_custom_call.1} parent=1 // pred_fallthru
      _
    // Predicated region
    $region14: #{tpu_custom_call.1} parent=1 // pred_check
      _
    $region15: #{tpu_custom_call.1} parent=1 // pred_check_branch
      %57 = sbr.rel (0) target = $region17
    $region16: #{tpu_custom_call.1} parent=1 // pred_region
      %59 = vsyncadd [#allocation9], 0
      %s60 = sshll.u32 %s3, 4
      %s61 = int_to_ptr.hbm [resolvable:$true] %s60
      %s62 = sshll.u32 [#allocation8], 4
      %s63 = int_to_ptr.vmem [resolvable:$true] %s62
      %68 = dma.hbm_to_vmem [thread:$0]  %s61, 16384, %s63, [#allocation9], 128, 128, 8
    $region17: #{tpu_custom_call.1} parent=1 // pred_fallthru
      _
    // Predicated region
    $region18: #{tpu_custom_call.1} parent=1 // pred_check
      _
    $region19: #{tpu_custom_call.1} parent=1 // pred_check_branch
      %70 = sbr.rel (0) target = $region21
    $region20: #{tpu_custom_call.1} parent=1 // pred_region
      _
    $region21: #{tpu_custom_call.1} parent=1 // pred_fallthru
      _
    // Predicated region
    $region22: #{tpu_custom_call.1} parent=1 // pred_check
      _
    $region23: #{tpu_custom_call.1} parent=1 // pred_check_branch
      %72 = sbr.rel (0) target = $region25
    $region24: #{tpu_custom_call.1} parent=1 // pred_region
      %74 = vsyncadd [#allocation9], 0
      %s75 = sshll.u32 %s5, 4
      %s76 = int_to_ptr.hbm [resolvable:$true] %s75
      %s77 = sshll.u32 [#allocation10], 4
      %s78 = int_to_ptr.vmem [resolvable:$true] %s77
      %83 = dma.hbm_to_vmem [thread:$0]  %s76, 2048, %s78, [#allocation9], 128, 128, 8
    $region25: #{tpu_custom_call.1} parent=1 // pred_fallthru
      _
    // Predicated region
    $region26: #{tpu_custom_call.1} parent=1 // pred_check
      _
    $region27: #{tpu_custom_call.1} parent=1 // pred_check_branch
      %85 = sbr.rel (0) target = $region29
    $region28: #{tpu_custom_call.1} parent=1 // pred_region
      _
    $region29: #{tpu_custom_call.1} parent=1 // pred_fallthru
      _
    // Predicated region
    $region30: #{tpu_custom_call.1} parent=1 // pred_check
      _
    $region31: #{tpu_custom_call.1} parent=1 // pred_check_branch
      %87 = sbr.rel (0) target = $region33
    $region32: #{tpu_custom_call.1} parent=1 // pred_region
      %89 = vsyncadd [#allocation12], 0
      %s90 = sshll.u32 %s7, 4
      %s91 = int_to_ptr.hbm [resolvable:$true] %s90
      %s92 = sshll.u32 [#allocation11], 4
      %s93 = int_to_ptr.vmem [resolvable:$true] %s92
      %98 = dma.hbm_to_vmem [thread:$0]  %s91, 2048, %s93, [#allocation12], 128, 128, 8
    $region33: #{tpu_custom_call.1} parent=1 // pred_fallthru
      _
    // Predicated region
    $region34: #{tpu_custom_call.1} parent=1 // pred_check
      _
    $region35: #{tpu_custom_call.1} parent=1 // pred_check_branch
      %100 = sbr.rel (0) target = $region37
    $region36: #{tpu_custom_call.1} parent=1 // pred_region
      _
    $region37: #{tpu_custom_call.1} parent=1 // pred_fallthru
      _
    // Predicated region
    $region38: #{tpu_custom_call.1} parent=1 // pred_check
      _
    $region39: #{tpu_custom_call.1} parent=1 // pred_check_branch
      %102 = sbr.rel (0) target = $region41
    $region40: #{tpu_custom_call.1} parent=1 // pred_region
      %104 = dma.done [#allocation3], 512
    $region41: #{tpu_custom_call.1} parent=1 // pred_fallthru
      _
    // Predicated region
    $region42: #{tpu_custom_call.1} parent=1 // pred_check
      _
    $region43: #{tpu_custom_call.1} parent=1 // pred_check_branch
      %106 = sbr.rel (0) target = $region45
    $region44: #{tpu_custom_call.1} parent=1 // pred_region
      %108 = dma.done [#allocation6], 5120
    $region45: #{tpu_custom_call.1} parent=1 // pred_fallthru
      _
    // Predicated region
    $region46: #{tpu_custom_call.1} parent=1 // pred_check
      _
    $region47: #{tpu_custom_call.1} parent=1 // pred_check_branch
      %110 = sbr.rel (0) target = $region49
    $region48: #{tpu_custom_call.1} parent=1 // pred_region
      %112 = dma.done [#allocation6], 128
    $region49: #{tpu_custom_call.1} parent=1 // pred_fallthru
      _
    // Predicated region
    $region50: #{tpu_custom_call.1} parent=1 // pred_check
      _
    $region51: #{tpu_custom_call.1} parent=1 // pred_check_branch
      %114 = sbr.rel (0) target = $region53
    $region52: #{tpu_custom_call.1} parent=1 // pred_region
      %116 = dma.done [#allocation9], 16384
    $region53: #{tpu_custom_call.1} parent=1 // pred_fallthru
      _
    // Predicated region
    $region54: #{tpu_custom_call.1} parent=1 // pred_check
      _
    $region55: #{tpu_custom_call.1} parent=1 // pred_check_branch
      %118 = sbr.rel (0) target = $region57
    $region56: #{tpu_custom_call.1} parent=1 // pred_region
      %120 = dma.done [#allocation9], 2048
    $region57: #{tpu_custom_call.1} parent=1 // pred_fallthru
      _
    // Predicated region
    $region58: #{tpu_custom_call.1} parent=1 // pred_check
      _
    $region59: #{tpu_custom_call.1} parent=1 // pred_check_branch
      %122 = sbr.rel (0) target = $region61
    $region60: #{tpu_custom_call.1} parent=1 // pred_region
      %124 = dma.done [#allocation12], 2048
    $region61: #{tpu_custom_call.1} parent=1 // pred_fallthru
      _
    %v125 = vld [vmem:[#allocation2] sm:$0xff]
    %v126 = vld [vmem:[#allocation2 + $0x8] sm:$0xff]
    %v127 = vld [vmem:[#allocation2 + $0x10] sm:$0xff]
    %v128 = vld [vmem:[#allocation2 + $0x18] sm:$0xff]
    %v129 = vld [vmem:[#allocation5] sm:$0xff]
    %v130 = vld [vmem:[#allocation5 + $0x8] sm:$0xff]
    %v131 = vld [vmem:[#allocation5 + $0x10] sm:$0xff]
    %v132 = vld [vmem:[#allocation5 + $0x18] sm:$0xff]
    %v133 = vld [vmem:[#allocation5 + $0x20] sm:$0xff]
    %v134 = vld [vmem:[#allocation5 + $0x28] sm:$0xff]
    %v135 = vld [vmem:[#allocation5 + $0x30] sm:$0xff]
    %v136 = vld [vmem:[#allocation5 + $0x38] sm:$0xff]
    %v137 = vld [vmem:[#allocation5 + $0x40] sm:$0xff]
    %v138 = vld [vmem:[#allocation5 + $0x48] sm:$0xff]
    %v139 = vld [vmem:[#allocation5 + $0x50] sm:$0xff]
    %v140 = vld [vmem:[#allocation5 + $0x58] sm:$0xff]
    %v141 = vld [vmem:[#allocation5 + $0x60] sm:$0xff]
    %v142 = vld [vmem:[#allocation5 + $0x68] sm:$0xff]
    %v143 = vld [vmem:[#allocation5 + $0x70] sm:$0xff]
    %v144 = vld [vmem:[#allocation5 + $0x78] sm:$0xff]
    %v145 = vld [vmem:[#allocation5 + $0x80] sm:$0xff]
    %v146 = vld [vmem:[#allocation5 + $0x88] sm:$0xff]
    %v147 = vld [vmem:[#allocation5 + $0x90] sm:$0xff]
    %v148 = vld [vmem:[#allocation5 + $0x98] sm:$0xff]
    %v149 = vld [vmem:[#allocation5 + $0xa0] sm:$0xff]
    %v150 = vld [vmem:[#allocation5 + $0xa8] sm:$0xff]
    %v151 = vld [vmem:[#allocation5 + $0xb0] sm:$0xff]
    %v152 = vld [vmem:[#allocation5 + $0xb8] sm:$0xff]
    %v153 = vld [vmem:[#allocation5 + $0xc0] sm:$0xff]
    %v154 = vld [vmem:[#allocation5 + $0xc8] sm:$0xff]
    %v155 = vld [vmem:[#allocation5 + $0xd0] sm:$0xff]
    %v156 = vld [vmem:[#allocation5 + $0xd8] sm:$0xff]
    %v157 = vld [vmem:[#allocation5 + $0xe0] sm:$0xff]
    %v158 = vld [vmem:[#allocation5 + $0xe8] sm:$0xff]
    %v159 = vld [vmem:[#allocation5 + $0xf0] sm:$0xff]
    %v160 = vld [vmem:[#allocation5 + $0xf8] sm:$0xff]
    %v161 = vld [vmem:[#allocation5 + $0x100] sm:$0x3]
    %v162 = vld [vmem:[#allocation5 + $0x108] sm:$0x3]
    %v163 = vld [vmem:[#allocation5 + $0x110] sm:$0x3]
    %v164 = vld [vmem:[#allocation5 + $0x118] sm:$0x3]
    %v165 = vld [vmem:[#allocation5 + $0x120] sm:$0x3]
    %v166 = vld [vmem:[#allocation5 + $0x128] sm:$0x3]
    %v167 = vld [vmem:[#allocation5 + $0x130] sm:$0x3]
    %v168 = vld [vmem:[#allocation5 + $0x138] sm:$0x3]
    %v169 = vld [vmem:[#allocation7] sm:$0xff]
    %v171 = vperm.slane %v169, 0
    %v172 = vperm.slane %v169, 1
    %v173 = vperm.slane %v169, 2
    %v174 = vperm.slane %v169, 3
    %v175 = vperm.slane %v169, 4
    %v176 = vperm.slane %v169, 5
    %v177 = vperm.slane %v169, 6
    %v178 = vperm.slane %v169, 7
    %vm187 = vcmask 277504
    %v189 = vsel %vm187, %v125, 0
    %v192 = vsel %vm187, %v126, 0
    %v195 = vsel %vm187, %v127, 0
    %v198 = vsel %vm187, %v128, 0
    %vm200 = vcmask 1041408
    %v202 = vsel %vm200, %v161, 0
    %v205 = vsel %vm200, %v162, 0
    %v208 = vsel %vm200, %v163, 0
    %v211 = vsel %vm200, %v164, 0
    %v214 = vsel %vm200, %v165, 0
    %v217 = vsel %vm200, %v166, 0
    %v220 = vsel %vm200, %v167, 0
    %v223 = vsel %vm200, %v168, 0
    %225 = vmatpush.msra.mxu0 0.0
    %226 = vmatpush.msra.mxu0 0.0
    %227 = vmatpush.msra.mxu0 0.0
    %228 = vmatpush.msra.mxu0 0.0
    %229 = vmatpush.msra.mxu0 0.0
    %230 = vmatpush.msra.mxu0 0.0
    %231 = vmatpush.msra.mxu0 0.0
    %232 = vmatpush.msra.mxu0 0.0
    %233 = vmatpush.msra.mxu0 0.0
    %234 = vmatpush.msra.mxu0 0.0
    %235 = vmatpush.msra.mxu0 0.0
    %236 = vmatpush.msra.mxu0 %v202
    %237 = vmatpush.msra.mxu0 %v153
    %238 = vmatpush.msra.mxu0 %v145
    %239 = vmatpush.msra.mxu0 %v137
    %240 = vmatpush.msra.mxu0 %v129
    %241 = vmatmul.f32.gmra.mxu0 %v189
    %v242 = vpop.f32.mrf.mxu0
    %v243 = vadd.f32 %v171, %v242
    %244 = vmatmul.f32.gmra.mxu0 %v192
    %v245 = vpop.f32.mrf.mxu0
    %v246 = vadd.f32 %v171, %v245
    %247 = vmatmul.f32.gmra.mxu0 %v195
    %v248 = vpop.f32.mrf.mxu0
    %v249 = vadd.f32 %v171, %v248
    %250 = vmatmul.f32.gmra.mxu0 %v198
    %v251 = vpop.f32.mrf.mxu0
    %v252 = vadd.f32 %v171, %v251
    %253 = vdwg.mxu0
    %254 = vmatpush.msra.mxu0 0.0
    %255 = vmatpush.msra.mxu0 0.0
    %256 = vmatpush.msra.mxu0 0.0
    %257 = vmatpush.msra.mxu0 0.0
    %258 = vmatpush.msra.mxu0 0.0
    %259 = vmatpush.msra.mxu0 0.0
    %260 = vmatpush.msra.mxu0 0.0
    %261 = vmatpush.msra.mxu0 0.0
    %262 = vmatpush.msra.mxu0 0.0
    %263 = vmatpush.msra.mxu0 0.0
    %264 = vmatpush.msra.mxu0 0.0
    %265 = vmatpush.msra.mxu0 %v205
    %266 = vmatpush.msra.mxu0 %v154
    %267 = vmatpush.msra.mxu0 %v146
    %268 = vmatpush.msra.mxu0 %v138
    %269 = vmatpush.msra.mxu0 %v130
    %270 = vmatmul.f32.gmra.mxu0 %v189
    %v271 = vpop.f32.mrf.mxu0
    %v272 = vadd.f32 %v172, %v271
    %273 = vmatmul.f32.gmra.mxu0 %v192
    %v274 = vpop.f32.mrf.mxu0
    %v275 = vadd.f32 %v172, %v274
    %276 = vmatmul.f32.gmra.mxu0 %v195
    %v277 = vpop.f32.mrf.mxu0
    %v278 = vadd.f32 %v172, %v277
    %279 = vmatmul.f32.gmra.mxu0 %v198
    %v280 = vpop.f32.mrf.mxu0
    %v281 = vadd.f32 %v172, %v280
    %282 = vdwg.mxu0
    %283 = vmatpush.msra.mxu0 0.0
    %284 = vmatpush.msra.mxu0 0.0
    %285 = vmatpush.msra.mxu0 0.0
    %286 = vmatpush.msra.mxu0 0.0
    %287 = vmatpush.msra.mxu0 0.0
    %288 = vmatpush.msra.mxu0 0.0
    %289 = vmatpush.msra.mxu0 0.0
    %290 = vmatpush.msra.mxu0 0.0
    %291 = vmatpush.msra.mxu0 0.0
    %292 = vmatpush.msra.mxu0 0.0
    %293 = vmatpush.msra.mxu0 0.0
    %294 = vmatpush.msra.mxu0 %v208
    %295 = vmatpush.msra.mxu0 %v155
    %296 = vmatpush.msra.mxu0 %v147
    %297 = vmatpush.msra.mxu0 %v139
    %298 = vmatpush.msra.mxu0 %v131
    %299 = vmatmul.f32.gmra.mxu0 %v189
    %v300 = vpop.f32.mrf.mxu0
    %v301 = vadd.f32 %v173, %v300
    %302 = vmatmul.f32.gmra.mxu0 %v192
    %v303 = vpop.f32.mrf.mxu0
    %v304 = vadd.f32 %v173, %v303
    %305 = vmatmul.f32.gmra.mxu0 %v195
    %v306 = vpop.f32.mrf.mxu0
    %v307 = vadd.f32 %v173, %v306
    %308 = vmatmul.f32.gmra.mxu0 %v198
    %v309 = vpop.f32.mrf.mxu0
    %v310 = vadd.f32 %v173, %v309
    %311 = vdwg.mxu0
    %312 = vmatpush.msra.mxu0 0.0
    %313 = vmatpush.msra.mxu0 0.0
    %314 = vmatpush.msra.mxu0 0.0
    %315 = vmatpush.msra.mxu0 0.0
    %316 = vmatpush.msra.mxu0 0.0
    %317 = vmatpush.msra.mxu0 0.0
    %318 = vmatpush.msra.mxu0 0.0
    %319 = vmatpush.msra.mxu0 0.0
    %320 = vmatpush.msra.mxu0 0.0
    %321 = vmatpush.msra.mxu0 0.0
    %322 = vmatpush.msra.mxu0 0.0
    %323 = vmatpush.msra.mxu0 %v211
    %324 = vmatpush.msra.mxu0 %v156
    %325 = vmatpush.msra.mxu0 %v148
    %326 = vmatpush.msra.mxu0 %v140
    %327 = vmatpush.msra.mxu0 %v132
    %328 = vmatmul.f32.gmra.mxu0 %v189
    %v329 = vpop.f32.mrf.mxu0
    %v330 = vadd.f32 %v174, %v329
    %331 = vmatmul.f32.gmra.mxu0 %v192
    %v332 = vpop.f32.mrf.mxu0
    %v333 = vadd.f32 %v174, %v332
    %334 = vmatmul.f32.gmra.mxu0 %v195
    %v335 = vpop.f32.mrf.mxu0
    %v336 = vadd.f32 %v174, %v335
    %337 = vmatmul.f32.gmra.mxu0 %v198
    %v338 = vpop.f32.mrf.mxu0
    %v339 = vadd.f32 %v174, %v338
    %340 = vdwg.mxu0
    %341 = vmatpush.msra.mxu0 0.0
    %342 = vmatpush.msra.mxu0 0.0
    %343 = vmatpush.msra.mxu0 0.0
    %344 = vmatpush.msra.mxu0 0.0
    %345 = vmatpush.msra.mxu0 0.0
    %346 = vmatpush.msra.mxu0 0.0
    %347 = vmatpush.msra.mxu0 0.0
    %348 = vmatpush.msra.mxu0 0.0
    %349 = vmatpush.msra.mxu0 0.0
    %350 = vmatpush.msra.mxu0 0.0
    %351 = vmatpush.msra.mxu0 0.0
    %352 = vmatpush.msra.mxu0 %v214
    %353 = vmatpush.msra.mxu0 %v157
    %354 = vmatpush.msra.mxu0 %v149
    %355 = vmatpush.msra.mxu0 %v141
    %356 = vmatpush.msra.mxu0 %v133
    %357 = vmatmul.f32.gmra.mxu0 %v189
    %v358 = vpop.f32.mrf.mxu0
    %v359 = vadd.f32 %v175, %v358
    %360 = vmatmul.f32.gmra.mxu0 %v192
    %v361 = vpop.f32.mrf.mxu0
    %v362 = vadd.f32 %v175, %v361
    %363 = vmatmul.f32.gmra.mxu0 %v195
    %v364 = vpop.f32.mrf.mxu0
    %v365 = vadd.f32 %v175, %v364
    %366 = vmatmul.f32.gmra.mxu0 %v198
    %v367 = vpop.f32.mrf.mxu0
    %v368 = vadd.f32 %v175, %v367
    %369 = vdwg.mxu0
    %370 = vmatpush.msra.mxu0 0.0
    %371 = vmatpush.msra.mxu0 0.0
    %372 = vmatpush.msra.mxu0 0.0
    %373 = vmatpush.msra.mxu0 0.0
    %374 = vmatpush.msra.mxu0 0.0
    %375 = vmatpush.msra.mxu0 0.0
    %376 = vmatpush.msra.mxu0 0.0
    %377 = vmatpush.msra.mxu0 0.0
    %378 = vmatpush.msra.mxu0 0.0
    %379 = vmatpush.msra.mxu0 0.0
    %380 = vmatpush.msra.mxu0 0.0
    %381 = vmatpush.msra.mxu0 %v217
    %382 = vmatpush.msra.mxu0 %v158
    %383 = vmatpush.msra.mxu0 %v150
    %384 = vmatpush.msra.mxu0 %v142
    %385 = vmatpush.msra.mxu0 %v134
    %386 = vmatmul.f32.gmra.mxu0 %v189
    %v387 = vpop.f32.mrf.mxu0
    %v388 = vadd.f32 %v176, %v387
    %389 = vmatmul.f32.gmra.mxu0 %v192
    %v390 = vpop.f32.mrf.mxu0
    %v391 = vadd.f32 %v176, %v390
    %392 = vmatmul.f32.gmra.mxu0 %v195
    %v393 = vpop.f32.mrf.mxu0
    %v394 = vadd.f32 %v176, %v393
    %395 = vmatmul.f32.gmra.mxu0 %v198
    %v396 = vpop.f32.mrf.mxu0
    %v397 = vadd.f32 %v176, %v396
    %398 = vdwg.mxu0
    %399 = vmatpush.msra.mxu0 0.0
    %400 = vmatpush.msra.mxu0 0.0
    %401 = vmatpush.msra.mxu0 0.0
    %402 = vmatpush.msra.mxu0 0.0
    %403 = vmatpush.msra.mxu0 0.0
    %404 = vmatpush.msra.mxu0 0.0
    %405 = vmatpush.msra.mxu0 0.0
    %406 = vmatpush.msra.mxu0 0.0
    %407 = vmatpush.msra.mxu0 0.0
    %408 = vmatpush.msra.mxu0 0.0
    %409 = vmatpush.msra.mxu0 0.0
    %410 = vmatpush.msra.mxu0 %v220
    %411 = vmatpush.msra.mxu0 %v159
    %412 = vmatpush.msra.mxu0 %v151
    %413 = vmatpush.msra.mxu0 %v143
    %414 = vmatpush.msra.mxu0 %v135
    %415 = vmatmul.f32.gmra.mxu0 %v189
    %v416 = vpop.f32.mrf.mxu0
    %v417 = vadd.f32 %v177, %v416
    %418 = vmatmul.f32.gmra.mxu0 %v192
    %v419 = vpop.f32.mrf.mxu0
    %v420 = vadd.f32 %v177, %v419
    %421 = vmatmul.f32.gmra.mxu0 %v195
    %v422 = vpop.f32.mrf.mxu0
    %v423 = vadd.f32 %v177, %v422
    %424 = vmatmul.f32.gmra.mxu0 %v198
    %v425 = vpop.f32.mrf.mxu0
    %v426 = vadd.f32 %v177, %v425
    %427 = vdwg.mxu0
    %428 = vmatpush.msra.mxu0 0.0
    %429 = vmatpush.msra.mxu0 0.0
    %430 = vmatpush.msra.mxu0 0.0
    %431 = vmatpush.msra.mxu0 0.0
    %432 = vmatpush.msra.mxu0 0.0
    %433 = vmatpush.msra.mxu0 0.0
    %434 = vmatpush.msra.mxu0 0.0
    %435 = vmatpush.msra.mxu0 0.0
    %436 = vmatpush.msra.mxu0 0.0
    %437 = vmatpush.msra.mxu0 0.0
    %438 = vmatpush.msra.mxu0 0.0
    %439 = vmatpush.msra.mxu0 %v223
    %440 = vmatpush.msra.mxu0 %v160
    %441 = vmatpush.msra.mxu0 %v152
    %442 = vmatpush.msra.mxu0 %v144
    %443 = vmatpush.msra.mxu0 %v136
    %444 = vmatmul.f32.gmra.mxu0 %v189
    %v445 = vpop.f32.mrf.mxu0
    %v446 = vadd.f32 %v178, %v445
    %447 = vmatmul.f32.gmra.mxu0 %v192
    %v448 = vpop.f32.mrf.mxu0
    %v449 = vadd.f32 %v178, %v448
    %450 = vmatmul.f32.gmra.mxu0 %v195
    %v451 = vpop.f32.mrf.mxu0
    %v452 = vadd.f32 %v178, %v451
    %453 = vmatmul.f32.gmra.mxu0 %v198
    %v454 = vpop.f32.mrf.mxu0
    %v455 = vadd.f32 %v178, %v454
    %456 = vdwg.mxu0
    %v457 = vmax.f32 %v243, 0.0
    %v458 = vmax.f32 %v272, 0.0
    %v459 = vmax.f32 %v301, 0.0
    %v460 = vmax.f32 %v330, 0.0
    %v461 = vmax.f32 %v359, 0.0
    %v462 = vmax.f32 %v388, 0.0
    %v463 = vmax.f32 %v417, 0.0
    %v464 = vmax.f32 %v446, 0.0
    %v465 = vmax.f32 %v246, 0.0
    %v466 = vmax.f32 %v275, 0.0
    %v467 = vmax.f32 %v304, 0.0
    %v468 = vmax.f32 %v333, 0.0
    %v469 = vmax.f32 %v362, 0.0
    %v470 = vmax.f32 %v391, 0.0
    %v471 = vmax.f32 %v420, 0.0
    %v472 = vmax.f32 %v449, 0.0
    %v473 = vmax.f32 %v249, 0.0
    %v474 = vmax.f32 %v278, 0.0
    %v475 = vmax.f32 %v307, 0.0
    %v476 = vmax.f32 %v336, 0.0
    %v477 = vmax.f32 %v365, 0.0
    %v478 = vmax.f32 %v394, 0.0
    %v479 = vmax.f32 %v423, 0.0
    %v480 = vmax.f32 %v452, 0.0
    %v481 = vmax.f32 %v252, 0.0
    %v482 = vmax.f32 %v281, 0.0
    %v483 = vmax.f32 %v310, 0.0
    %v484 = vmax.f32 %v339, 0.0
    %v485 = vmax.f32 %v368, 0.0
    %v486 = vmax.f32 %v397, 0.0
    %v487 = vmax.f32 %v426, 0.0
    %v488 = vmax.f32 %v455, 0.0
    %v489 = vld [vmem:[#allocation8] sm:$0xff]
    %v490 = vld [vmem:[#allocation8 + $0x8] sm:$0xff]
    %v491 = vld [vmem:[#allocation8 + $0x10] sm:$0xff]
    %v492 = vld [vmem:[#allocation8 + $0x18] sm:$0xff]
    %v493 = vld [vmem:[#allocation8 + $0x20] sm:$0xff]
    %v494 = vld [vmem:[#allocation8 + $0x28] sm:$0xff]
    %v495 = vld [vmem:[#allocation8 + $0x30] sm:$0xff]
    %v496 = vld [vmem:[#allocation8 + $0x38] sm:$0xff]
    %v497 = vld [vmem:[#allocation8 + $0x40] sm:$0xff]
    %v498 = vld [vmem:[#allocation8 + $0x48] sm:$0xff]
    %v499 = vld [vmem:[#allocation8 + $0x50] sm:$0xff]
    %v500 = vld [vmem:[#allocation8 + $0x58] sm:$0xff]
    %v501 = vld [vmem:[#allocation8 + $0x60] sm:$0xff]
    %v502 = vld [vmem:[#allocation8 + $0x68] sm:$0xff]
    %v503 = vld [vmem:[#allocation8 + $0x70] sm:$0xff]
    %v504 = vld [vmem:[#allocation8 + $0x78] sm:$0xff]
    %v505 = vld [vmem:[#allocation8 + $0x80] sm:$0xff]
    %v506 = vld [vmem:[#allocation8 + $0x88] sm:$0xff]
    %v507 = vld [vmem:[#allocation8 + $0x90] sm:$0xff]
    %v508 = vld [vmem:[#allocation8 + $0x98] sm:$0xff]
    %v509 = vld [vmem:[#allocation8 + $0xa0] sm:$0xff]
    %v510 = vld [vmem:[#allocation8 + $0xa8] sm:$0xff]
    %v511 = vld [vmem:[#allocation8 + $0xb0] sm:$0xff]
    %v512 = vld [vmem:[#allocation8 + $0xb8] sm:$0xff]
    %v513 = vld [vmem:[#allocation8 + $0xc0] sm:$0xff]
    %v514 = vld [vmem:[#allocation8 + $0xc8] sm:$0xff]
    %v515 = vld [vmem:[#allocation8 + $0xd0] sm:$0xff]
    %v516 = vld [vmem:[#allocation8 + $0xd8] sm:$0xff]
    %v517 = vld [vmem:[#allocation8 + $0xe0] sm:$0xff]
    %v518 = vld [vmem:[#allocation8 + $0xe8] sm:$0xff]
    %v519 = vld [vmem:[#allocation8 + $0xf0] sm:$0xff]
    %v520 = vld [vmem:[#allocation8 + $0xf8] sm:$0xff]
    %v521 = vld [vmem:[#allocation8 + $0x100] sm:$0xff]
    %v522 = vld [vmem:[#allocation8 + $0x108] sm:$0xff]
    %v523 = vld [vmem:[#allocation8 + $0x110] sm:$0xff]
    %v524 = vld [vmem:[#allocation8 + $0x118] sm:$0xff]
    %v525 = vld [vmem:[#allocation8 + $0x120] sm:$0xff]
    %v526 = vld [vmem:[#allocation8 + $0x128] sm:$0xff]
    %v527 = vld [vmem:[#allocation8 + $0x130] sm:$0xff]
    %v528 = vld [vmem:[#allocation8 + $0x138] sm:$0xff]
    %v529 = vld [vmem:[#allocation8 + $0x140] sm:$0xff]
    %v530 = vld [vmem:[#allocation8 + $0x148] sm:$0xff]
    %v531 = vld [vmem:[#allocation8 + $0x150] sm:$0xff]
    %v532 = vld [vmem:[#allocation8 + $0x158] sm:$0xff]
    %v533 = vld [vmem:[#allocation8 + $0x160] sm:$0xff]
    %v534 = vld [vmem:[#allocation8 + $0x168] sm:$0xff]
    %v535 = vld [vmem:[#allocation8 + $0x170] sm:$0xff]
    %v536 = vld [vmem:[#allocation8 + $0x178] sm:$0xff]
    %v537 = vld [vmem:[#allocation8 + $0x180] sm:$0xff]
    %v538 = vld [vmem:[#allocation8 + $0x188] sm:$0xff]
    %v539 = vld [vmem:[#allocation8 + $0x190] sm:$0xff]
    %v540 = vld [vmem:[#allocation8 + $0x198] sm:$0xff]
    %v541 = vld [vmem:[#allocation8 + $0x1a0] sm:$0xff]
    %v542 = vld [vmem:[#allocation8 + $0x1a8] sm:$0xff]
    %v543 = vld [vmem:[#allocation8 + $0x1b0] sm:$0xff]
    %v544 = vld [vmem:[#allocation8 + $0x1b8] sm:$0xff]
    %v545 = vld [vmem:[#allocation8 + $0x1c0] sm:$0xff]
    %v546 = vld [vmem:[#allocation8 + $0x1c8] sm:$0xff]
    %v547 = vld [vmem:[#allocation8 + $0x1d0] sm:$0xff]
    %v548 = vld [vmem:[#allocation8 + $0x1d8] sm:$0xff]
    %v549 = vld [vmem:[#allocation8 + $0x1e0] sm:$0xff]
    %v550 = vld [vmem:[#allocation8 + $0x1e8] sm:$0xff]
    %v551 = vld [vmem:[#allocation8 + $0x1f0] sm:$0xff]
    %v552 = vld [vmem:[#allocation8 + $0x1f8] sm:$0xff]
    %v553 = vld [vmem:[#allocation8 + $0x200] sm:$0xff]
    %v554 = vld [vmem:[#allocation8 + $0x208] sm:$0xff]
    %v555 = vld [vmem:[#allocation8 + $0x210] sm:$0xff]
    %v556 = vld [vmem:[#allocation8 + $0x218] sm:$0xff]
    %v557 = vld [vmem:[#allocation8 + $0x220] sm:$0xff]
    %v558 = vld [vmem:[#allocation8 + $0x228] sm:$0xff]
    %v559 = vld [vmem:[#allocation8 + $0x230] sm:$0xff]
    %v560 = vld [vmem:[#allocation8 + $0x238] sm:$0xff]
    %v561 = vld [vmem:[#allocation8 + $0x240] sm:$0xff]
    %v562 = vld [vmem:[#allocation8 + $0x248] sm:$0xff]
    %v563 = vld [vmem:[#allocation8 + $0x250] sm:$0xff]
    %v564 = vld [vmem:[#allocation8 + $0x258] sm:$0xff]
    %v565 = vld [vmem:[#allocation8 + $0x260] sm:$0xff]
    %v566 = vld [vmem:[#allocation8 + $0x268] sm:$0xff]
    %v567 = vld [vmem:[#allocation8 + $0x270] sm:$0xff]
    %v568 = vld [vmem:[#allocation8 + $0x278] sm:$0xff]
    %v569 = vld [vmem:[#allocation8 + $0x280] sm:$0xff]
    %v570 = vld [vmem:[#allocation8 + $0x288] sm:$0xff]
    %v571 = vld [vmem:[#allocation8 + $0x290] sm:$0xff]
    %v572 = vld [vmem:[#allocation8 + $0x298] sm:$0xff]
    %v573 = vld [vmem:[#allocation8 + $0x2a0] sm:$0xff]
    %v574 = vld [vmem:[#allocation8 + $0x2a8] sm:$0xff]
    %v575 = vld [vmem:[#allocation8 + $0x2b0] sm:$0xff]
    %v576 = vld [vmem:[#allocation8 + $0x2b8] sm:$0xff]
    %v577 = vld [vmem:[#allocation8 + $0x2c0] sm:$0xff]
    %v578 = vld [vmem:[#allocation8 + $0x2c8] sm:$0xff]
    %v579 = vld [vmem:[#allocation8 + $0x2d0] sm:$0xff]
    %v580 = vld [vmem:[#allocation8 + $0x2d8] sm:$0xff]
    %v581 = vld [vmem:[#allocation8 + $0x2e0] sm:$0xff]
    %v582 = vld [vmem:[#allocation8 + $0x2e8] sm:$0xff]
    %v583 = vld [vmem:[#allocation8 + $0x2f0] sm:$0xff]
    %v584 = vld [vmem:[#allocation8 + $0x2f8] sm:$0xff]
    %v585 = vld [vmem:[#allocation8 + $0x300] sm:$0xff]
    %v586 = vld [vmem:[#allocation8 + $0x308] sm:$0xff]
    %v587 = vld [vmem:[#allocation8 + $0x310] sm:$0xff]
    %v588 = vld [vmem:[#allocation8 + $0x318] sm:$0xff]
    %v589 = vld [vmem:[#allocation8 + $0x320] sm:$0xff]
    %v590 = vld [vmem:[#allocation8 + $0x328] sm:$0xff]
    %v591 = vld [vmem:[#allocation8 + $0x330] sm:$0xff]
    %v592 = vld [vmem:[#allocation8 + $0x338] sm:$0xff]
    %v593 = vld [vmem:[#allocation8 + $0x340] sm:$0xff]
    %v594 = vld [vmem:[#allocation8 + $0x348] sm:$0xff]
    %v595 = vld [vmem:[#allocation8 + $0x350] sm:$0xff]
    %v596 = vld [vmem:[#allocation8 + $0x358] sm:$0xff]
    %v597 = vld [vmem:[#allocation8 + $0x360] sm:$0xff]
    %v598 = vld [vmem:[#allocation8 + $0x368] sm:$0xff]
    %v599 = vld [vmem:[#allocation8 + $0x370] sm:$0xff]
    %v600 = vld [vmem:[#allocation8 + $0x378] sm:$0xff]
    %v601 = vld [vmem:[#allocation8 + $0x380] sm:$0xff]
    %v602 = vld [vmem:[#allocation8 + $0x388] sm:$0xff]
    %v603 = vld [vmem:[#allocation8 + $0x390] sm:$0xff]
    %v604 = vld [vmem:[#allocation8 + $0x398] sm:$0xff]
    %v605 = vld [vmem:[#allocation8 + $0x3a0] sm:$0xff]
    %v606 = vld [vmem:[#allocation8 + $0x3a8] sm:$0xff]
    %v607 = vld [vmem:[#allocation8 + $0x3b0] sm:$0xff]
    %v608 = vld [vmem:[#allocation8 + $0x3b8] sm:$0xff]
    %v609 = vld [vmem:[#allocation8 + $0x3c0] sm:$0xff]
    %v610 = vld [vmem:[#allocation8 + $0x3c8] sm:$0xff]
    %v611 = vld [vmem:[#allocation8 + $0x3d0] sm:$0xff]
    %v612 = vld [vmem:[#allocation8 + $0x3d8] sm:$0xff]
    %v613 = vld [vmem:[#allocation8 + $0x3e0] sm:$0xff]
    %v614 = vld [vmem:[#allocation8 + $0x3e8] sm:$0xff]
    %v615 = vld [vmem:[#allocation8 + $0x3f0] sm:$0xff]
    %v616 = vld [vmem:[#allocation8 + $0x3f8] sm:$0xff]
    %v617 = vld [vmem:[%s4] sm:$0x1]
    %v619 = vperm.slane %v617, 0
    %621 = vmatpush.msra.mxu0 %v504
    %622 = vmatpush.msra.mxu0 %v503
    %623 = vmatpush.msra.mxu0 %v502
    %624 = vmatpush.msra.mxu0 %v501
    %625 = vmatpush.msra.mxu0 %v500
    %626 = vmatpush.msra.mxu0 %v499
    %627 = vmatpush.msra.mxu0 %v498
    %628 = vmatpush.msra.mxu0 %v497
    %629 = vmatpush.msra.mxu0 %v496
    %630 = vmatpush.msra.mxu0 %v495
    %631 = vmatpush.msra.mxu0 %v494
    %632 = vmatpush.msra.mxu0 %v493
    %633 = vmatpush.msra.mxu0 %v492
    %634 = vmatpush.msra.mxu0 %v491
    %635 = vmatpush.msra.mxu0 %v490
    %636 = vmatpush.msra.mxu0 %v489
    %637 = vmatmul.f32.gmra.mxu0 %v457
    %v638 = vpop.f32.mrf.mxu0
    %v639 = vadd.f32 %v619, %v638
    %640 = vmatmul.f32.gmra.mxu0 %v465
    %v641 = vpop.f32.mrf.mxu0
    %v642 = vadd.f32 %v619, %v641
    %643 = vmatmul.f32.gmra.mxu0 %v473
    %v644 = vpop.f32.mrf.mxu0
    %v645 = vadd.f32 %v619, %v644
    %646 = vmatmul.f32.gmra.mxu0 %v481
    %v647 = vpop.f32.mrf.mxu0
    %v648 = vadd.f32 %v619, %v647
    %649 = vdwg.mxu0
    %650 = vmatpush.msra.mxu0 %v520
    %651 = vmatpush.msra.mxu0 %v519
    %652 = vmatpush.msra.mxu0 %v518
    %653 = vmatpush.msra.mxu0 %v517
    %654 = vmatpush.msra.mxu0 %v516
    %655 = vmatpush.msra.mxu0 %v515
    %656 = vmatpush.msra.mxu0 %v514
    %657 = vmatpush.msra.mxu0 %v513
    %658 = vmatpush.msra.mxu0 %v512
    %659 = vmatpush.msra.mxu0 %v511
    %660 = vmatpush.msra.mxu0 %v510
    %661 = vmatpush.msra.mxu0 %v509
    %662 = vmatpush.msra.mxu0 %v508
    %663 = vmatpush.msra.mxu0 %v507
    %664 = vmatpush.msra.mxu0 %v506
    %665 = vmatpush.msra.mxu0 %v505
    %666 = vmatmul.f32.gmra.mxu0 %v458
    %v667 = vpop.f32.mrf.mxu0
    %v668 = vadd.f32 %v639, %v667
    %669 = vmatmul.f32.gmra.mxu0 %v466
    %v670 = vpop.f32.mrf.mxu0
    %v671 = vadd.f32 %v642, %v670
    %672 = vmatmul.f32.gmra.mxu0 %v474
    %v673 = vpop.f32.mrf.mxu0
    %v674 = vadd.f32 %v645, %v673
    %675 = vmatmul.f32.gmra.mxu0 %v482
    %v676 = vpop.f32.mrf.mxu0
    %v677 = vadd.f32 %v648, %v676
    %678 = vdwg.mxu0
    %679 = vmatpush.msra.mxu0 %v536
    %680 = vmatpush.msra.mxu0 %v535
    %681 = vmatpush.msra.mxu0 %v534
    %682 = vmatpush.msra.mxu0 %v533
    %683 = vmatpush.msra.mxu0 %v532
    %684 = vmatpush.msra.mxu0 %v531
    %685 = vmatpush.msra.mxu0 %v530
    %686 = vmatpush.msra.mxu0 %v529
    %687 = vmatpush.msra.mxu0 %v528
    %688 = vmatpush.msra.mxu0 %v527
    %689 = vmatpush.msra.mxu0 %v526
    %690 = vmatpush.msra.mxu0 %v525
    %691 = vmatpush.msra.mxu0 %v524
    %692 = vmatpush.msra.mxu0 %v523
    %693 = vmatpush.msra.mxu0 %v522
    %694 = vmatpush.msra.mxu0 %v521
    %695 = vmatmul.f32.gmra.mxu0 %v459
    %v696 = vpop.f32.mrf.mxu0
    %v697 = vadd.f32 %v668, %v696
    %698 = vmatmul.f32.gmra.mxu0 %v467
    %v699 = vpop.f32.mrf.mxu0
    %v700 = vadd.f32 %v671, %v699
    %701 = vmatmul.f32.gmra.mxu0 %v475
    %v702 = vpop.f32.mrf.mxu0
    %v703 = vadd.f32 %v674, %v702
    %704 = vmatmul.f32.gmra.mxu0 %v483
    %v705 = vpop.f32.mrf.mxu0
    %v706 = vadd.f32 %v677, %v705
    %707 = vdwg.mxu0
    %708 = vmatpush.msra.mxu0 %v552
    %709 = vmatpush.msra.mxu0 %v551
    %710 = vmatpush.msra.mxu0 %v550
    %711 = vmatpush.msra.mxu0 %v549
    %712 = vmatpush.msra.mxu0 %v548
    %713 = vmatpush.msra.mxu0 %v547
    %714 = vmatpush.msra.mxu0 %v546
    %715 = vmatpush.msra.mxu0 %v545
    %716 = vmatpush.msra.mxu0 %v544
    %717 = vmatpush.msra.mxu0 %v543
    %718 = vmatpush.msra.mxu0 %v542
    %719 = vmatpush.msra.mxu0 %v541
    %720 = vmatpush.msra.mxu0 %v540
    %721 = vmatpush.msra.mxu0 %v539
    %722 = vmatpush.msra.mxu0 %v538
    %723 = vmatpush.msra.mxu0 %v537
    %724 = vmatmul.f32.gmra.mxu0 %v460
    %v725 = vpop.f32.mrf.mxu0
    %v726 = vadd.f32 %v697, %v725
    %727 = vmatmul.f32.gmra.mxu0 %v468
    %v728 = vpop.f32.mrf.mxu0
    %v729 = vadd.f32 %v700, %v728
    %730 = vmatmul.f32.gmra.mxu0 %v476
    %v731 = vpop.f32.mrf.mxu0
    %v732 = vadd.f32 %v703, %v731
    %733 = vmatmul.f32.gmra.mxu0 %v484
    %v734 = vpop.f32.mrf.mxu0
    %v735 = vadd.f32 %v706, %v734
    %736 = vdwg.mxu0
    %737 = vmatpush.msra.mxu0 %v568
    %738 = vmatpush.msra.mxu0 %v567
    %739 = vmatpush.msra.mxu0 %v566
    %740 = vmatpush.msra.mxu0 %v565
    %741 = vmatpush.msra.mxu0 %v564
    %742 = vmatpush.msra.mxu0 %v563
    %743 = vmatpush.msra.mxu0 %v562
    %744 = vmatpush.msra.mxu0 %v561
    %745 = vmatpush.msra.mxu0 %v560
    %746 = vmatpush.msra.mxu0 %v559
    %747 = vmatpush.msra.mxu0 %v558
    %748 = vmatpush.msra.mxu0 %v557
    %749 = vmatpush.msra.mxu0 %v556
    %750 = vmatpush.msra.mxu0 %v555
    %751 = vmatpush.msra.mxu0 %v554
    %752 = vmatpush.msra.mxu0 %v553
    %753 = vmatmul.f32.gmra.mxu0 %v461
    %v754 = vpop.f32.mrf.mxu0
    %v755 = vadd.f32 %v726, %v754
    %756 = vmatmul.f32.gmra.mxu0 %v469
    %v757 = vpop.f32.mrf.mxu0
    %v758 = vadd.f32 %v729, %v757
    %759 = vmatmul.f32.gmra.mxu0 %v477
    %v760 = vpop.f32.mrf.mxu0
    %v761 = vadd.f32 %v732, %v760
    %762 = vmatmul.f32.gmra.mxu0 %v485
    %v763 = vpop.f32.mrf.mxu0
    %v764 = vadd.f32 %v735, %v763
    %765 = vdwg.mxu0
    %766 = vmatpush.msra.mxu0 %v584
    %767 = vmatpush.msra.mxu0 %v583
    %768 = vmatpush.msra.mxu0 %v582
    %769 = vmatpush.msra.mxu0 %v581
    %770 = vmatpush.msra.mxu0 %v580
    %771 = vmatpush.msra.mxu0 %v579
    %772 = vmatpush.msra.mxu0 %v578
    %773 = vmatpush.msra.mxu0 %v577
    %774 = vmatpush.msra.mxu0 %v576
    %775 = vmatpush.msra.mxu0 %v575
    %776 = vmatpush.msra.mxu0 %v574
    %777 = vmatpush.msra.mxu0 %v573
    %778 = vmatpush.msra.mxu0 %v572
    %779 = vmatpush.msra.mxu0 %v571
    %780 = vmatpush.msra.mxu0 %v570
    %781 = vmatpush.msra.mxu0 %v569
    %782 = vmatmul.f32.gmra.mxu0 %v462
    %v783 = vpop.f32.mrf.mxu0
    %v784 = vadd.f32 %v755, %v783
    %785 = vmatmul.f32.gmra.mxu0 %v470
    %v786 = vpop.f32.mrf.mxu0
    %v787 = vadd.f32 %v758, %v786
    %788 = vmatmul.f32.gmra.mxu0 %v478
    %v789 = vpop.f32.mrf.mxu0
    %v790 = vadd.f32 %v761, %v789
    %791 = vmatmul.f32.gmra.mxu0 %v486
    %v792 = vpop.f32.mrf.mxu0
    %v793 = vadd.f32 %v764, %v792
    %794 = vdwg.mxu0
    %795 = vmatpush.msra.mxu0 %v600
    %796 = vmatpush.msra.mxu0 %v599
    %797 = vmatpush.msra.mxu0 %v598
    %798 = vmatpush.msra.mxu0 %v597
    %799 = vmatpush.msra.mxu0 %v596
    %800 = vmatpush.msra.mxu0 %v595
    %801 = vmatpush.msra.mxu0 %v594
    %802 = vmatpush.msra.mxu0 %v593
    %803 = vmatpush.msra.mxu0 %v592
    %804 = vmatpush.msra.mxu0 %v591
    %805 = vmatpush.msra.mxu0 %v590
    %806 = vmatpush.msra.mxu0 %v589
    %807 = vmatpush.msra.mxu0 %v588
    %808 = vmatpush.msra.mxu0 %v587
    %809 = vmatpush.msra.mxu0 %v586
    %810 = vmatpush.msra.mxu0 %v585
    %811 = vmatmul.f32.gmra.mxu0 %v463
    %v812 = vpop.f32.mrf.mxu0
    %v813 = vadd.f32 %v784, %v812
    %814 = vmatmul.f32.gmra.mxu0 %v471
    %v815 = vpop.f32.mrf.mxu0
    %v816 = vadd.f32 %v787, %v815
    %817 = vmatmul.f32.gmra.mxu0 %v479
    %v818 = vpop.f32.mrf.mxu0
    %v819 = vadd.f32 %v790, %v818
    %820 = vmatmul.f32.gmra.mxu0 %v487
    %v821 = vpop.f32.mrf.mxu0
    %v822 = vadd.f32 %v793, %v821
    %823 = vdwg.mxu0
    %824 = vmatpush.msra.mxu0 %v616
    %825 = vmatpush.msra.mxu0 %v615
    %826 = vmatpush.msra.mxu0 %v614
    %827 = vmatpush.msra.mxu0 %v613
    %828 = vmatpush.msra.mxu0 %v612
    %829 = vmatpush.msra.mxu0 %v611
    %830 = vmatpush.msra.mxu0 %v610
    %831 = vmatpush.msra.mxu0 %v609
    %832 = vmatpush.msra.mxu0 %v608
    %833 = vmatpush.msra.mxu0 %v607
    %834 = vmatpush.msra.mxu0 %v606
    %835 = vmatpush.msra.mxu0 %v605
    %836 = vmatpush.msra.mxu0 %v604
    %837 = vmatpush.msra.mxu0 %v603
    %838 = vmatpush.msra.mxu0 %v602
    %839 = vmatpush.msra.mxu0 %v601
    %840 = vmatmul.f32.gmra.mxu0 %v464
    %v841 = vpop.f32.mrf.mxu0
    %v842 = vadd.f32 %v813, %v841
    %843 = vmatmul.f32.gmra.mxu0 %v472
    %v844 = vpop.f32.mrf.mxu0
    %v845 = vadd.f32 %v816, %v844
    %846 = vmatmul.f32.gmra.mxu0 %v480
    %v847 = vpop.f32.mrf.mxu0
    %v848 = vadd.f32 %v819, %v847
    %849 = vmatmul.f32.gmra.mxu0 %v488
    %v850 = vpop.f32.mrf.mxu0
    %v851 = vadd.f32 %v822, %v850
    %852 = vdwg.mxu0
    %v853 = vmax.f32 %v842, 0.0
    %v854 = vmax.f32 %v845, 0.0
    %v855 = vmax.f32 %v848, 0.0
    %v856 = vmax.f32 %v851, 0.0
    %v857 = vld [vmem:[#allocation10] sm:$0xff]
    %v858 = vld [vmem:[#allocation10 + $0x8] sm:$0xff]
    %v859 = vld [vmem:[#allocation10 + $0x10] sm:$0xff]
    %v860 = vld [vmem:[#allocation10 + $0x18] sm:$0xff]
    %v861 = vld [vmem:[#allocation10 + $0x20] sm:$0xff]
    %v862 = vld [vmem:[#allocation10 + $0x28] sm:$0xff]
    %v863 = vld [vmem:[#allocation10 + $0x30] sm:$0xff]
    %v864 = vld [vmem:[#allocation10 + $0x38] sm:$0xff]
    %v865 = vld [vmem:[#allocation10 + $0x40] sm:$0xff]
    %v866 = vld [vmem:[#allocation10 + $0x48] sm:$0xff]
    %v867 = vld [vmem:[#allocation10 + $0x50] sm:$0xff]
    %v868 = vld [vmem:[#allocation10 + $0x58] sm:$0xff]
    %v869 = vld [vmem:[#allocation10 + $0x60] sm:$0xff]
    %v870 = vld [vmem:[#allocation10 + $0x68] sm:$0xff]
    %v871 = vld [vmem:[#allocation10 + $0x70] sm:$0xff]
    %v872 = vld [vmem:[#allocation10 + $0x78] sm:$0xff]
    %v873 = vld [vmem:[%s6] sm:$0x1]
    %v875 = vperm.slane %v873, 0
    %877 = vmatpush.msra.mxu0 %v872
    %878 = vmatpush.msra.mxu0 %v871
    %879 = vmatpush.msra.mxu0 %v870
    %880 = vmatpush.msra.mxu0 %v869
    %881 = vmatpush.msra.mxu0 %v868
    %882 = vmatpush.msra.mxu0 %v867
    %883 = vmatpush.msra.mxu0 %v866
    %884 = vmatpush.msra.mxu0 %v865
    %885 = vmatpush.msra.mxu0 %v864
    %886 = vmatpush.msra.mxu0 %v863
    %887 = vmatpush.msra.mxu0 %v862
    %888 = vmatpush.msra.mxu0 %v861
    %889 = vmatpush.msra.mxu0 %v860
    %890 = vmatpush.msra.mxu0 %v859
    %891 = vmatpush.msra.mxu0 %v858
    %892 = vmatpush.msra.mxu0 %v857
    %893 = vmatmul.f32.gmra.mxu0 %v853
    %v894 = vpop.f32.mrf.mxu0
    %v895 = vadd.f32 %v875, %v894
    %896 = vmatmul.f32.gmra.mxu0 %v854
    %v897 = vpop.f32.mrf.mxu0
    %v898 = vadd.f32 %v875, %v897
    %899 = vmatmul.f32.gmra.mxu0 %v855
    %v900 = vpop.f32.mrf.mxu0
    %v901 = vadd.f32 %v875, %v900
    %902 = vmatmul.f32.gmra.mxu0 %v856
    %v903 = vpop.f32.mrf.mxu0
    %v904 = vadd.f32 %v875, %v903
    %905 = vdwg.mxu0
    %v906 = vmax.f32 %v895, 0.0
    %v907 = vmax.f32 %v898, 0.0
    %v908 = vmax.f32 %v901, 0.0
    %v909 = vmax.f32 %v904, 0.0
    %v910 = vld [vmem:[#allocation11] sm:$0xff]
    %v911 = vld [vmem:[#allocation11 + $0x8] sm:$0xff]
    %v912 = vld [vmem:[#allocation11 + $0x10] sm:$0xff]
    %v913 = vld [vmem:[#allocation11 + $0x18] sm:$0xff]
    %v914 = vld [vmem:[#allocation11 + $0x20] sm:$0xff]
    %v915 = vld [vmem:[#allocation11 + $0x28] sm:$0xff]
    %v916 = vld [vmem:[#allocation11 + $0x30] sm:$0xff]
    %v917 = vld [vmem:[#allocation11 + $0x38] sm:$0xff]
    %v918 = vld [vmem:[#allocation11 + $0x40] sm:$0xff]
    %v919 = vld [vmem:[#allocation11 + $0x48] sm:$0xff]
    %v920 = vld [vmem:[#allocation11 + $0x50] sm:$0xff]
    %v921 = vld [vmem:[#allocation11 + $0x58] sm:$0xff]
    %v922 = vld [vmem:[#allocation11 + $0x60] sm:$0xff]
    %v923 = vld [vmem:[#allocation11 + $0x68] sm:$0xff]
    %v924 = vld [vmem:[#allocation11 + $0x70] sm:$0xff]
    %v925 = vld [vmem:[#allocation11 + $0x78] sm:$0xff]
    %v926 = vld [vmem:[%s8] sm:$0x1]
    %v928 = vperm.slane %v926, 0
    %930 = vmatpush.msra.mxu0 %v925
    %931 = vmatpush.msra.mxu0 %v924
    %932 = vmatpush.msra.mxu0 %v923
    %933 = vmatpush.msra.mxu0 %v922
    %934 = vmatpush.msra.mxu0 %v921
    %935 = vmatpush.msra.mxu0 %v920
    %936 = vmatpush.msra.mxu0 %v919
    %937 = vmatpush.msra.mxu0 %v918
    %938 = vmatpush.msra.mxu0 %v917
    %939 = vmatpush.msra.mxu0 %v916
    %940 = vmatpush.msra.mxu0 %v915
    %941 = vmatpush.msra.mxu0 %v914
    %942 = vmatpush.msra.mxu0 %v913
    %943 = vmatpush.msra.mxu0 %v912
    %944 = vmatpush.msra.mxu0 %v911
    %945 = vmatpush.msra.mxu0 %v910
    %946 = vmatmul.f32.gmra.mxu0 %v906
    %v947 = vpop.f32.mrf.mxu0
    %v948 = vadd.f32 %v928, %v947
    %949 = vmatmul.f32.gmra.mxu0 %v907
    %v950 = vpop.f32.mrf.mxu0
    %v951 = vadd.f32 %v928, %v950
    %952 = vmatmul.f32.gmra.mxu0 %v908
    %v953 = vpop.f32.mrf.mxu0
    %v954 = vadd.f32 %v928, %v953
    %955 = vmatmul.f32.gmra.mxu0 %v909
    %v956 = vpop.f32.mrf.mxu0
    %v957 = vadd.f32 %v928, %v956
    %958 = vdwg.mxu0
    %959 = vst [vmem:[#allocation13] sm:$0xff] %v948
    %960 = vst [vmem:[#allocation13 + $0x8] sm:$0xff] %v951
    %961 = vst [vmem:[#allocation13 + $0x10] sm:$0xff] %v954
    %962 = vst [vmem:[#allocation13 + $0x18] sm:$0xff] %v957
    // Predicated region
    $region62: #{tpu_custom_call.1} parent=1 // pred_check
      _
    $region63: #{tpu_custom_call.1} parent=1 // pred_check_branch
      %964 = sbr.rel (0) target = $region65
    $region64: #{tpu_custom_call.1} parent=1 // pred_region
      %966 = vsyncadd [#allocation4], 0
      %s967 = sshll.u32 [#allocation13], 4
      %s968 = int_to_ptr.vmem [resolvable:$true] %s967
      %s969 = sshll.u32 %s9, 4
      %s970 = int_to_ptr.hbm [resolvable:$true] %s969
      %975 = dma.vmem_to_hbm [thread:$0]  %s968, 512, %s970, [#allocation4], 128, 128, 8
    $region65: #{tpu_custom_call.1} parent=1 // pred_fallthru
      _
    // Predicated region
    $region66: #{tpu_custom_call.1} parent=1 // pred_check
      _
    $region67: #{tpu_custom_call.1} parent=1 // pred_check_branch
      %977 = sbr.rel (0) target = $region69
    $region68: #{tpu_custom_call.1} parent=1 // pred_region
      %979 = dma.done [#allocation4], 512
    $region69: #{tpu_custom_call.1} parent=1 // pred_fallthru
      _
    %980 = vsyncpa [#allocation3], 1
    %981 = vsyncpa [#allocation6], 1
    %982 = vsyncpa [#allocation9], 1
    %983 = vsyncpa [#allocation12], 1
    %984 = vsyncpa [#allocation4], 1

</llo_original>
